<compile_context>
chip_gen: v7x
topology: tpu7x:2x2x1
jax: 0.10.0
libtpu: 0.0.40
codegen_flags: <defaults>
</compile_context>

<pallas_src>
import jax
import jax.numpy as jnp
from jax import lax
from jax.experimental import pallas as pl
from jax.experimental.pallas import tpu as pltpu

# ---- example sizes (small, consistent with the module) ----
B, CIN, COUT, H, W = 2, 4, 8, 16, 16
KH = KW = 3  # kernel_size=3, padding=1 -> same spatial size


def conv_module_forward(x_nchw, weight, bias):
    """Forward of ConvModulePT: relu(conv2d(x, weight, bias, padding=1)).

    x_nchw: (B, Cin, H, W)    (PyTorch NCHW)
    weight: (Cout, Cin, 3, 3) (PyTorch OIHW)
    bias  : (Cout,)
    returns (B, Cout, H, W)
    """
    b_n, cin, h, w = x_nchw.shape
    cout, _, kh, kw = weight.shape
    hw = h * w
    k = kh * kw * cin

    # Row-padded flat buffer: 1 front zero + H-padded image rows + slack so every
    # tap slice [start, start + hw) stays in bounds.  Round lanes to 128.
    need = (kh - 1) * w + (kw - 1) + hw + 1
    lpad = pl.cdiv(need, 128) * 128

    def kernel(x_ref, w_ref, b_ref, o_ref, xbuf_ref, slab_ref):
        # x_ref: (B, Cin, H*W)   w_ref: (Cout, K)   b_ref: (Cout, 1)
        # o_ref: (B, Cout, H*W)
        # xbuf_ref: (Cin, lpad) row-padded flat image;  slab_ref: (K, H*W) im2col slab
        col = lax.broadcasted_iota(jnp.int32, (cin, hw), 1) % w
        xbuf_ref[...] = jnp.zeros_like(xbuf_ref)  # zero halo once (interior rewritten)
        for b in range(b_n):
            # Interior rows of the H-padded image, flattened (front offset 1 + w).
            xbuf_ref[:, 1 + w:1 + w + hw] = x_ref[b]
            for dh in range(kh):
                for dw in range(kw):
                    # Each tap is a contiguous hw-wide slice of the flat buffer.
                    start = dh * w + dw
                    piece = xbuf_ref[:, start:start + hw]
                    shift = dw - (kw // 2)  # column shift: -1, 0, +1
                    if shift < 0:
                        piece = jnp.where(col >= -shift, piece, 0.0)
                    elif shift > 0:
                        piece = jnp.where(col < w - shift, piece, 0.0)
                    tap = dh * kw + dw
                    slab_ref[tap * cin:(tap + 1) * cin, :] = piece
            # One fused matmul per image: (Cout, K) x (K, H*W) -> (Cout, H*W).
            y = jnp.dot(w_ref[...], slab_ref[...],
                        preferred_element_type=jnp.float32)
            y = jnp.maximum(y + b_ref[...], 0.0)  # bias + ReLU
            o_ref[b] = y.astype(o_ref.dtype)

    # Host-side glue: free / tiny reshapes only (no activation transpose, no pad HLO).
    x_flat = x_nchw.reshape(b_n, cin, hw)
    w_mat = jnp.transpose(weight, (0, 2, 3, 1)).reshape(cout, k)  # rows: (dh, dw, cin)
    b_col = bias.reshape(cout, 1)

    flops = 2 * b_n * hw * k * cout
    bytes_accessed = 4 * (b_n * cin * hw + cout * k + cout + b_n * cout * hw)

    out_flat = pl.pallas_call(
        kernel,
        out_shape=jax.ShapeDtypeStruct((b_n, cout, hw), x_nchw.dtype),
        in_specs=[
            pl.BlockSpec(memory_space=pltpu.MemorySpace.VMEM),
            pl.BlockSpec(memory_space=pltpu.MemorySpace.VMEM),
            pl.BlockSpec(memory_space=pltpu.MemorySpace.VMEM),
        ],
        out_specs=pl.BlockSpec(memory_space=pltpu.MemorySpace.VMEM),
        scratch_shapes=[
            pltpu.VMEM((cin, lpad), jnp.float32),
            pltpu.VMEM((k, hw), jnp.float32),
        ],
        cost_estimate=pl.CostEstimate(
            flops=flops, transcendentals=0, bytes_accessed=bytes_accessed),
    )(x_flat, w_mat, b_col)

    # Free contiguous reshape back to (B, Cout, H, W).
    return out_flat.reshape(b_n, cout, h, w)


def init_params(key):
    """Deterministic init matching nn.Conv2d default (kaiming-uniform-ish)."""
    kw_key, kb_key = jax.random.split(key)
    fan_in = CIN * KH * KW
    bound = 1.0 / jnp.sqrt(fan_in)
    weight = jax.random.uniform(kw_key, (COUT, CIN, KH, KW), jnp.float32,
                                minval=-bound, maxval=bound)
    bias = jax.random.uniform(kb_key, (COUT,), jnp.float32,
                              minval=-bound, maxval=bound)
    return weight, bias


if __name__ == "__main__":
    key = jax.random.PRNGKey(0)
    kx, kp = jax.random.split(key)
    x = jax.random.normal(kx, (B, CIN, H, W), dtype=jnp.float32)
    weight, bias = init_params(kp)

    out = conv_module_forward(x, weight, bias)
    out = jax.block_until_ready(out)

    # Sanity check against pure-JAX reference (conv + bias + relu).
    ref = lax.conv_general_dilated(
        x, weight, window_strides=(1, 1), padding=((1, 1), (1, 1)),
        dimension_numbers=("NCHW", "OIHW", "NCHW"))
    ref = jnp.maximum(ref + bias.reshape(1, COUT, 1, 1), 0.0)
    assert out.shape == (B, COUT, H, W)
    assert jnp.allclose(out, ref, atol=1e-4, rtol=1e-4)

    print("KERNEL_OK")
</pallas_src>

<mosaic_0001>
module attributes {stable_mosaic.version = 11 : i64} {
  func.func @kernel(%arg0: memref<2x4x256xf32, #tpu.memory_space<vmem>>, %arg1: memref<8x36xf32, #tpu.memory_space<vmem>>, %arg2: memref<8x1xf32, #tpu.memory_space<vmem>>, %arg3: memref<2x8x256xf32, #tpu.memory_space<vmem>>, %arg4: memref<4x384xf32, #tpu.memory_space<vmem>>, %arg5: memref<36x256xf32, #tpu.memory_space<vmem>>) attributes {dimension_semantics = [], scalar_prefetch = 0 : i64, scratch_operands = 2 : i64, tpu.core_type = #tpu.core_type<tc>} {
    %0 = tpu.iota {dimensions = array<i32: 1>} : vector<4x256xi32>
    %c16_i32 = arith.constant 16 : i32
    %c0_i32 = arith.constant 0 : i32
    %1 = arith.cmpi eq, %c16_i32, %c0_i32 : i32
    %c1_i32 = arith.constant 1 : i32
    %2 = arith.select %1, %c1_i32, %c16_i32 : i32
    %3 = vector.broadcast %2 : i32 to vector<4x256xi32>
    %4 = arith.remsi %0, %3 : vector<4x256xi32>
    %c0_i32_0 = arith.constant 0 : i32
    %5 = vector.broadcast %c0_i32_0 : i32 to vector<4x256xi32>
    %6 = arith.cmpi ne, %4, %5 : vector<4x256xi32>
    %c0_i32_1 = arith.constant 0 : i32
    %7 = vector.broadcast %c0_i32_1 : i32 to vector<4x256xi32>
    %8 = arith.cmpi slt, %4, %7 : vector<4x256xi32>
    %c0_i32_2 = arith.constant 0 : i32
    %9 = arith.cmpi slt, %2, %c0_i32_2 : i32
    %10 = vector.broadcast %9 : i1 to vector<4x256xi1>
    %11 = vector.broadcast %10 : vector<4x256xi1> to vector<4x256xi1>
    %12 = arith.xori %8, %11 : vector<4x256xi1>
    %13 = arith.andi %12, %6 : vector<4x256xi1>
    %14 = vector.broadcast %2 : i32 to vector<4x256xi32>
    %15 = arith.addi %4, %14 : vector<4x256xi32>
    %16 = arith.select %13, %15, %4 : vector<4x256xi1>, vector<4x256xi32>
    %cst = arith.constant 0.000000e+00 : f32
    %17 = vector.broadcast %cst : f32 to vector<4x384xf32>
    %c0 = arith.constant 0 : index
    %c0_3 = arith.constant 0 : index
    %18 = vector.load %arg4[%c0, %c0_3] : memref<4x384xf32, #tpu.memory_space<vmem>>, vector<4x384xf32>
    tpu.vector_store %arg4[%c0, %c0_3], %17 {strides = array<i32>} : memref<4x384xf32, #tpu.memory_space<vmem>>, vector<4x384xf32>,
    %c0_4 = arith.constant 0 : index
    %c0_5 = arith.constant 0 : index
    %c0_6 = arith.constant 0 : index
    %19 = vector.load %arg0[%c0_4, %c0_5, %c0_6] : memref<2x4x256xf32, #tpu.memory_space<vmem>>, vector<1x4x256xf32>
    %20 = vector.shape_cast %19 : vector<1x4x256xf32> to vector<4x256xf32>
    %c0_7 = arith.constant 0 : index
    %c17 = arith.constant 17 : index
    %21 = vector.load %arg4[%c0_7, %c17] : memref<4x384xf32, #tpu.memory_space<vmem>>, vector<4x256xf32>
    tpu.vector_store %arg4[%c0_7, %c17], %20 {strides = array<i32>} : memref<4x384xf32, #tpu.memory_space<vmem>>, vector<4x256xf32>,
    %c0_8 = arith.constant 0 : index
    %c0_9 = arith.constant 0 : index
    %22 = vector.load %arg4[%c0_8, %c0_9] : memref<4x384xf32, #tpu.memory_space<vmem>>, vector<4x256xf32>
    %c1_i32_10 = arith.constant 1 : i32
    %23 = vector.broadcast %c1_i32_10 : i32 to vector<4x256xi32>
    %24 = arith.cmpi sge, %16, %23 : vector<4x256xi32>
    %cst_11 = arith.constant 0.000000e+00 : f32
    %25 = vector.broadcast %cst_11 : f32 to vector<4x256xf32>
    %26 = arith.select %24, %22, %25 : vector<4x256xi1>, vector<4x256xf32>
    %c0_12 = arith.constant 0 : index
    %c0_13 = arith.constant 0 : index
    %27 = vector.load %arg5[%c0_12, %c0_13] : memref<36x256xf32, #tpu.memory_space<vmem>>, vector<4x256xf32>
    tpu.vector_store %arg5[%c0_12, %c0_13], %26 {strides = array<i32>} : memref<36x256xf32, #tpu.memory_space<vmem>>, vector<4x256xf32>,
    %c0_14 = arith.constant 0 : index
    %c1 = arith.constant 1 : index
    %28 = vector.load %arg4[%c0_14, %c1] : memref<4x384xf32, #tpu.memory_space<vmem>>, vector<4x256xf32>
    %c4 = arith.constant 4 : index
    %c0_15 = arith.constant 0 : index
    %29 = vector.load %arg5[%c4, %c0_15] : memref<36x256xf32, #tpu.memory_space<vmem>>, vector<4x256xf32>
    tpu.vector_store %arg5[%c4, %c0_15], %28 {strides = array<i32>} : memref<36x256xf32, #tpu.memory_space<vmem>>, vector<4x256xf32>,
    %c0_16 = arith.constant 0 : index
    %c2 = arith.constant 2 : index
    %30 = vector.load %arg4[%c0_16, %c2] : memref<4x384xf32, #tpu.memory_space<vmem>>, vector<4x256xf32>
    %c15_i32 = arith.constant 15 : i32
    %31 = vector.broadcast %c15_i32 : i32 to vector<4x256xi32>
    %32 = arith.cmpi slt, %16, %31 : vector<4x256xi32>
    %cst_17 = arith.constant 0.000000e+00 : f32
    %33 = vector.broadcast %cst_17 : f32 to vector<4x256xf32>
    %34 = arith.select %32, %30, %33 : vector<4x256xi1>, vector<4x256xf32>
    %c8 = arith.constant 8 : index
    %c0_18 = arith.constant 0 : index
    %35 = vector.load %arg5[%c8, %c0_18] : memref<36x256xf32, #tpu.memory_space<vmem>>, vector<4x256xf32>
    tpu.vector_store %arg5[%c8, %c0_18], %34 {strides = array<i32>} : memref<36x256xf32, #tpu.memory_space<vmem>>, vector<4x256xf32>,
    %c0_19 = arith.constant 0 : index
    %c16 = arith.constant 16 : index
    %36 = vector.load %arg4[%c0_19, %c16] : memref<4x384xf32, #tpu.memory_space<vmem>>, vector<4x256xf32>
    %c1_i32_20 = arith.constant 1 : i32
    %37 = vector.broadcast %c1_i32_20 : i32 to vector<4x256xi32>
    %38 = arith.cmpi sge, %16, %37 : vector<4x256xi32>
    %cst_21 = arith.constant 0.000000e+00 : f32
    %39 = vector.broadcast %cst_21 : f32 to vector<4x256xf32>
    %40 = arith.select %38, %36, %39 : vector<4x256xi1>, vector<4x256xf32>
    %c12 = arith.constant 12 : index
    %c0_22 = arith.constant 0 : index
    %41 = vector.load %arg5[%c12, %c0_22] : memref<36x256xf32, #tpu.memory_space<vmem>>, vector<4x256xf32>
    tpu.vector_store %arg5[%c12, %c0_22], %40 {strides = array<i32>} : memref<36x256xf32, #tpu.memory_space<vmem>>, vector<4x256xf32>,
    %c0_23 = arith.constant 0 : index
    %c17_24 = arith.constant 17 : index
    %42 = vector.load %arg4[%c0_23, %c17_24] : memref<4x384xf32, #tpu.memory_space<vmem>>, vector<4x256xf32>
    %c16_25 = arith.constant 16 : index
    %c0_26 = arith.constant 0 : index
    %43 = vector.load %arg5[%c16_25, %c0_26] : memref<36x256xf32, #tpu.memory_space<vmem>>, vector<4x256xf32>
    tpu.vector_store %arg5[%c16_25, %c0_26], %42 {strides = array<i32>} : memref<36x256xf32, #tpu.memory_space<vmem>>, vector<4x256xf32>,
    %c0_27 = arith.constant 0 : index
    %c18 = arith.constant 18 : index
    %44 = vector.load %arg4[%c0_27, %c18] : memref<4x384xf32, #tpu.memory_space<vmem>>, vector<4x256xf32>
    %c15_i32_28 = arith.constant 15 : i32
    %45 = vector.broadcast %c15_i32_28 : i32 to vector<4x256xi32>
    %46 = arith.cmpi slt, %16, %45 : vector<4x256xi32>
    %cst_29 = arith.constant 0.000000e+00 : f32
    %47 = vector.broadcast %cst_29 : f32 to vector<4x256xf32>
    %48 = arith.select %46, %44, %47 : vector<4x256xi1>, vector<4x256xf32>
    %c20 = arith.constant 20 : index
    %c0_30 = arith.constant 0 : index
    %49 = vector.load %arg5[%c20, %c0_30] : memref<36x256xf32, #tpu.memory_space<vmem>>, vector<4x256xf32>
    tpu.vector_store %arg5[%c20, %c0_30], %48 {strides = array<i32>} : memref<36x256xf32, #tpu.memory_space<vmem>>, vector<4x256xf32>,
    %c0_31 = arith.constant 0 : index
    %c32 = arith.constant 32 : index
    %50 = vector.load %arg4[%c0_31, %c32] : memref<4x384xf32, #tpu.memory_space<vmem>>, vector<4x256xf32>
    %c1_i32_32 = arith.constant 1 : i32
    %51 = vector.broadcast %c1_i32_32 : i32 to vector<4x256xi32>
    %52 = arith.cmpi sge, %16, %51 : vector<4x256xi32>
    %cst_33 = arith.constant 0.000000e+00 : f32
    %53 = vector.broadcast %cst_33 : f32 to vector<4x256xf32>
    %54 = arith.select %52, %50, %53 : vector<4x256xi1>, vector<4x256xf32>
    %c24 = arith.constant 24 : index
    %c0_34 = arith.constant 0 : index
    %55 = vector.load %arg5[%c24, %c0_34] : memref<36x256xf32, #tpu.memory_space<vmem>>, vector<4x256xf32>
    tpu.vector_store %arg5[%c24, %c0_34], %54 {strides = array<i32>} : memref<36x256xf32, #tpu.memory_space<vmem>>, vector<4x256xf32>,
    %c0_35 = arith.constant 0 : index
    %c33 = arith.constant 33 : index
    %56 = vector.load %arg4[%c0_35, %c33] : memref<4x384xf32, #tpu.memory_space<vmem>>, vector<4x256xf32>
    %c28 = arith.constant 28 : index
    %c0_36 = arith.constant 0 : index
    %57 = vector.load %arg5[%c28, %c0_36] : memref<36x256xf32, #tpu.memory_space<vmem>>, vector<4x256xf32>
    tpu.vector_store %arg5[%c28, %c0_36], %56 {strides = array<i32>} : memref<36x256xf32, #tpu.memory_space<vmem>>, vector<4x256xf32>,
    %c0_37 = arith.constant 0 : index
    %c34 = arith.constant 34 : index
    %58 = vector.load %arg4[%c0_37, %c34] : memref<4x384xf32, #tpu.memory_space<vmem>>, vector<4x256xf32>
    %c15_i32_38 = arith.constant 15 : i32
    %59 = vector.broadcast %c15_i32_38 : i32 to vector<4x256xi32>
    %60 = arith.cmpi slt, %16, %59 : vector<4x256xi32>
    %cst_39 = arith.constant 0.000000e+00 : f32
    %61 = vector.broadcast %cst_39 : f32 to vector<4x256xf32>
    %62 = arith.select %60, %58, %61 : vector<4x256xi1>, vector<4x256xf32>
    %c32_40 = arith.constant 32 : index
    %c0_41 = arith.constant 0 : index
    %63 = vector.load %arg5[%c32_40, %c0_41] : memref<36x256xf32, #tpu.memory_space<vmem>>, vector<4x256xf32>
    tpu.vector_store %arg5[%c32_40, %c0_41], %62 {strides = array<i32>} : memref<36x256xf32, #tpu.memory_space<vmem>>, vector<4x256xf32>,
    %c0_42 = arith.constant 0 : index
    %c0_43 = arith.constant 0 : index
    %64 = vector.load %arg1[%c0_42, %c0_43] : memref<8x36xf32, #tpu.memory_space<vmem>>, vector<8x36xf32>
    %c0_44 = arith.constant 0 : index
    %c0_45 = arith.constant 0 : index
    %65 = vector.load %arg5[%c0_44, %c0_45] : memref<36x256xf32, #tpu.memory_space<vmem>>, vector<36x256xf32>
    %cst_46 = arith.constant dense<0.000000e+00> : vector<8x256xf32>
    %66 = tpu.matmul %64, %65, %cst_46 {dimension_numbers = #tpu.dot_dimension_numbers<[1], [0], [0], [1], [0, 0, 1, 1], [], []>} : vector<8x36xf32>, vector<36x256xf32>, vector<8x256xf32> -> vector<8x256xf32>
    %c0_47 = arith.constant 0 : index
    %c0_48 = arith.constant 0 : index
    %67 = vector.load %arg2[%c0_47, %c0_48] : memref<8x1xf32, #tpu.memory_space<vmem>>, vector<8x1xf32>
    %68 = vector.broadcast %67 : vector<8x1xf32> to vector<8x256xf32>
    %69 = arith.addf %66, %68 : vector<8x256xf32>
    %cst_49 = arith.constant 0.000000e+00 : f32
    %70 = vector.broadcast %cst_49 : f32 to vector<8x256xf32>
    %71 = arith.maximumf %69, %70 : vector<8x256xf32>
    %c0_50 = arith.constant 0 : index
    %c0_51 = arith.constant 0 : index
    %c0_52 = arith.constant 0 : index
    %72 = vector.load %arg3[%c0_50, %c0_51, %c0_52] : memref<2x8x256xf32, #tpu.memory_space<vmem>>, vector<1x8x256xf32>
    %73 = vector.shape_cast %72 : vector<1x8x256xf32> to vector<8x256xf32>
    %74 = vector.shape_cast %71 : vector<8x256xf32> to vector<1x8x256xf32>
    tpu.vector_store %arg3[%c0_50, %c0_51, %c0_52], %74 {strides = array<i32>} : memref<2x8x256xf32, #tpu.memory_space<vmem>>, vector<1x8x256xf32>,
    %c1_53 = arith.constant 1 : index
    %c0_54 = arith.constant 0 : index
    %c0_55 = arith.constant 0 : index
    %75 = vector.load %arg0[%c1_53, %c0_54, %c0_55] : memref<2x4x256xf32, #tpu.memory_space<vmem>>, vector<1x4x256xf32>
    %76 = vector.shape_cast %75 : vector<1x4x256xf32> to vector<4x256xf32>
    %c0_56 = arith.constant 0 : index
    %c17_57 = arith.constant 17 : index
    %77 = vector.load %arg4[%c0_56, %c17_57] : memref<4x384xf32, #tpu.memory_space<vmem>>, vector<4x256xf32>
    tpu.vector_store %arg4[%c0_56, %c17_57], %76 {strides = array<i32>} : memref<4x384xf32, #tpu.memory_space<vmem>>, vector<4x256xf32>,
    %c0_58 = arith.constant 0 : index
    %c0_59 = arith.constant 0 : index
    %78 = vector.load %arg4[%c0_58, %c0_59] : memref<4x384xf32, #tpu.memory_space<vmem>>, vector<4x256xf32>
    %c1_i32_60 = arith.constant 1 : i32
    %79 = vector.broadcast %c1_i32_60 : i32 to vector<4x256xi32>
    %80 = arith.cmpi sge, %16, %79 : vector<4x256xi32>
    %cst_61 = arith.constant 0.000000e+00 : f32
    %81 = vector.broadcast %cst_61 : f32 to vector<4x256xf32>
    %82 = arith.select %80, %78, %81 : vector<4x256xi1>, vector<4x256xf32>
    %c0_62 = arith.constant 0 : index
    %c0_63 = arith.constant 0 : index
    %83 = vector.load %arg5[%c0_62, %c0_63] : memref<36x256xf32, #tpu.memory_space<vmem>>, vector<4x256xf32>
    tpu.vector_store %arg5[%c0_62, %c0_63], %82 {strides = array<i32>} : memref<36x256xf32, #tpu.memory_space<vmem>>, vector<4x256xf32>,
    %c0_64 = arith.constant 0 : index
    %c1_65 = arith.constant 1 : index
    %84 = vector.load %arg4[%c0_64, %c1_65] : memref<4x384xf32, #tpu.memory_space<vmem>>, vector<4x256xf32>
    %c4_66 = arith.constant 4 : index
    %c0_67 = arith.constant 0 : index
    %85 = vector.load %arg5[%c4_66, %c0_67] : memref<36x256xf32, #tpu.memory_space<vmem>>, vector<4x256xf32>
    tpu.vector_store %arg5[%c4_66, %c0_67], %84 {strides = array<i32>} : memref<36x256xf32, #tpu.memory_space<vmem>>, vector<4x256xf32>,
    %c0_68 = arith.constant 0 : index
    %c2_69 = arith.constant 2 : index
    %86 = vector.load %arg4[%c0_68, %c2_69] : memref<4x384xf32, #tpu.memory_space<vmem>>, vector<4x256xf32>
    %c15_i32_70 = arith.constant 15 : i32
    %87 = vector.broadcast %c15_i32_70 : i32 to vector<4x256xi32>
    %88 = arith.cmpi slt, %16, %87 : vector<4x256xi32>
    %cst_71 = arith.constant 0.000000e+00 : f32
    %89 = vector.broadcast %cst_71 : f32 to vector<4x256xf32>
    %90 = arith.select %88, %86, %89 : vector<4x256xi1>, vector<4x256xf32>
    %c8_72 = arith.constant 8 : index
    %c0_73 = arith.constant 0 : index
    %91 = vector.load %arg5[%c8_72, %c0_73] : memref<36x256xf32, #tpu.memory_space<vmem>>, vector<4x256xf32>
    tpu.vector_store %arg5[%c8_72, %c0_73], %90 {strides = array<i32>} : memref<36x256xf32, #tpu.memory_space<vmem>>, vector<4x256xf32>,
    %c0_74 = arith.constant 0 : index
    %c16_75 = arith.constant 16 : index
    %92 = vector.load %arg4[%c0_74, %c16_75] : memref<4x384xf32, #tpu.memory_space<vmem>>, vector<4x256xf32>
    %c1_i32_76 = arith.constant 1 : i32
    %93 = vector.broadcast %c1_i32_76 : i32 to vector<4x256xi32>
    %94 = arith.cmpi sge, %16, %93 : vector<4x256xi32>
    %cst_77 = arith.constant 0.000000e+00 : f32
    %95 = vector.broadcast %cst_77 : f32 to vector<4x256xf32>
    %96 = arith.select %94, %92, %95 : vector<4x256xi1>, vector<4x256xf32>
    %c12_78 = arith.constant 12 : index
    %c0_79 = arith.constant 0 : index
    %97 = vector.load %arg5[%c12_78, %c0_79] : memref<36x256xf32, #tpu.memory_space<vmem>>, vector<4x256xf32>
    tpu.vector_store %arg5[%c12_78, %c0_79], %96 {strides = array<i32>} : memref<36x256xf32, #tpu.memory_space<vmem>>, vector<4x256xf32>,
    %c0_80 = arith.constant 0 : index
    %c17_81 = arith.constant 17 : index
    %98 = vector.load %arg4[%c0_80, %c17_81] : memref<4x384xf32, #tpu.memory_space<vmem>>, vector<4x256xf32>
    %c16_82 = arith.constant 16 : index
    %c0_83 = arith.constant 0 : index
    %99 = vector.load %arg5[%c16_82, %c0_83] : memref<36x256xf32, #tpu.memory_space<vmem>>, vector<4x256xf32>
    tpu.vector_store %arg5[%c16_82, %c0_83], %98 {strides = array<i32>} : memref<36x256xf32, #tpu.memory_space<vmem>>, vector<4x256xf32>,
    %c0_84 = arith.constant 0 : index
    %c18_85 = arith.constant 18 : index
    %100 = vector.load %arg4[%c0_84, %c18_85] : memref<4x384xf32, #tpu.memory_space<vmem>>, vector<4x256xf32>
    %c15_i32_86 = arith.constant 15 : i32
    %101 = vector.broadcast %c15_i32_86 : i32 to vector<4x256xi32>
    %102 = arith.cmpi slt, %16, %101 : vector<4x256xi32>
    %cst_87 = arith.constant 0.000000e+00 : f32
    %103 = vector.broadcast %cst_87 : f32 to vector<4x256xf32>
    %104 = arith.select %102, %100, %103 : vector<4x256xi1>, vector<4x256xf32>
    %c20_88 = arith.constant 20 : index
    %c0_89 = arith.constant 0 : index
    %105 = vector.load %arg5[%c20_88, %c0_89] : memref<36x256xf32, #tpu.memory_space<vmem>>, vector<4x256xf32>
    tpu.vector_store %arg5[%c20_88, %c0_89], %104 {strides = array<i32>} : memref<36x256xf32, #tpu.memory_space<vmem>>, vector<4x256xf32>,
    %c0_90 = arith.constant 0 : index
    %c32_91 = arith.constant 32 : index
    %106 = vector.load %arg4[%c0_90, %c32_91] : memref<4x384xf32, #tpu.memory_space<vmem>>, vector<4x256xf32>
    %c1_i32_92 = arith.constant 1 : i32
    %107 = vector.broadcast %c1_i32_92 : i32 to vector<4x256xi32>
    %108 = arith.cmpi sge, %16, %107 : vector<4x256xi32>
    %cst_93 = arith.constant 0.000000e+00 : f32
    %109 = vector.broadcast %cst_93 : f32 to vector<4x256xf32>
    %110 = arith.select %108, %106, %109 : vector<4x256xi1>, vector<4x256xf32>
    %c24_94 = arith.constant 24 : index
    %c0_95 = arith.constant 0 : index
    %111 = vector.load %arg5[%c24_94, %c0_95] : memref<36x256xf32, #tpu.memory_space<vmem>>, vector<4x256xf32>
    tpu.vector_store %arg5[%c24_94, %c0_95], %110 {strides = array<i32>} : memref<36x256xf32, #tpu.memory_space<vmem>>, vector<4x256xf32>,
    %c0_96 = arith.constant 0 : index
    %c33_97 = arith.constant 33 : index
    %112 = vector.load %arg4[%c0_96, %c33_97] : memref<4x384xf32, #tpu.memory_space<vmem>>, vector<4x256xf32>
    %c28_98 = arith.constant 28 : index
    %c0_99 = arith.constant 0 : index
    %113 = vector.load %arg5[%c28_98, %c0_99] : memref<36x256xf32, #tpu.memory_space<vmem>>, vector<4x256xf32>
    tpu.vector_store %arg5[%c28_98, %c0_99], %112 {strides = array<i32>} : memref<36x256xf32, #tpu.memory_space<vmem>>, vector<4x256xf32>,
    %c0_100 = arith.constant 0 : index
    %c34_101 = arith.constant 34 : index
    %114 = vector.load %arg4[%c0_100, %c34_101] : memref<4x384xf32, #tpu.memory_space<vmem>>, vector<4x256xf32>
    %c15_i32_102 = arith.constant 15 : i32
    %115 = vector.broadcast %c15_i32_102 : i32 to vector<4x256xi32>
    %116 = arith.cmpi slt, %16, %115 : vector<4x256xi32>
    %cst_103 = arith.constant 0.000000e+00 : f32
    %117 = vector.broadcast %cst_103 : f32 to vector<4x256xf32>
    %118 = arith.select %116, %114, %117 : vector<4x256xi1>, vector<4x256xf32>
    %c32_104 = arith.constant 32 : index
    %c0_105 = arith.constant 0 : index
    %119 = vector.load %arg5[%c32_104, %c0_105] : memref<36x256xf32, #tpu.memory_space<vmem>>, vector<4x256xf32>
    tpu.vector_store %arg5[%c32_104, %c0_105], %118 {strides = array<i32>} : memref<36x256xf32, #tpu.memory_space<vmem>>, vector<4x256xf32>,
    %c0_106 = arith.constant 0 : index
    %c0_107 = arith.constant 0 : index
    %120 = vector.load %arg1[%c0_106, %c0_107] : memref<8x36xf32, #tpu.memory_space<vmem>>, vector<8x36xf32>
    %c0_108 = arith.constant 0 : index
    %c0_109 = arith.constant 0 : index
    %121 = vector.load %arg5[%c0_108, %c0_109] : memref<36x256xf32, #tpu.memory_space<vmem>>, vector<36x256xf32>
    %cst_110 = arith.constant dense<0.000000e+00> : vector<8x256xf32>
    %122 = tpu.matmul %120, %121, %cst_110 {dimension_numbers = #tpu.dot_dimension_numbers<[1], [0], [0], [1], [0, 0, 1, 1], [], []>} : vector<8x36xf32>, vector<36x256xf32>, vector<8x256xf32> -> vector<8x256xf32>
    %c0_111 = arith.constant 0 : index
    %c0_112 = arith.constant 0 : index
    %123 = vector.load %arg2[%c0_111, %c0_112] : memref<8x1xf32, #tpu.memory_space<vmem>>, vector<8x1xf32>
    %124 = vector.broadcast %123 : vector<8x1xf32> to vector<8x256xf32>
    %125 = arith.addf %122, %124 : vector<8x256xf32>
    %cst_113 = arith.constant 0.000000e+00 : f32
    %126 = vector.broadcast %cst_113 : f32 to vector<8x256xf32>
    %127 = arith.maximumf %125, %126 : vector<8x256xf32>
    %c1_114 = arith.constant 1 : index
    %c0_115 = arith.constant 0 : index
    %c0_116 = arith.constant 0 : index
    %128 = vector.load %arg3[%c1_114, %c0_115, %c0_116] : memref<2x8x256xf32, #tpu.memory_space<vmem>>, vector<1x8x256xf32>
    %129 = vector.shape_cast %128 : vector<1x8x256xf32> to vector<8x256xf32>
    %130 = vector.shape_cast %127 : vector<8x256xf32> to vector<1x8x256xf32>
    tpu.vector_store %arg3[%c1_114, %c0_115, %c0_116], %130 {strides = array<i32>} : memref<2x8x256xf32, #tpu.memory_space<vmem>>, vector<1x8x256xf32>,
    return
  }
}

</mosaic_0001>

<llo_original>
// kernel: tpu_custom_call.1
$region0: #{tpu_custom_call.1}
  #allocation0 [shape = 'u32[]', space=smem, size = 0x4, offset = 0x4, fixed_abs, tag = 'smem constant byte address 0x4 - core index']
  #allocation1 [shape = 'u32[144,128]{1,0:T(1,128)}', space=vmem, size = 0x12000, scoped, tag = 'internal scratch']
  #allocation2 [shape = 'f32[4,384]{1,0:T(4,128)}', space=vmem, size = 0x1800, scoped, tag = 'scratch operand']
  #allocation3 [shape = 'f32[36,256]{1,0:T(8,128)}', space=vmem, size = 0xa000, scoped, tag = 'scratch operand']
  %s0 = inlined_call_operand.hbm [shape: f32[2,4,256], index: 0, kind: input, shape index: {}]
  %s1 = inlined_call_operand.vmem [shape: f32[8,36], index: 1, kind: input, shape index: {}]
  %s2 = inlined_call_operand.vmem [shape: f32[8,1], index: 2, kind: input, shape index: {}]
  %s3 = inlined_call_operand.hbm [shape: f32[2,8,256], index: 3, kind: output, shape index: {}]
  %s4 = sld [smem:[#allocation0]]
  $region26: #{tpu_custom_call.1} parent=0
    _
  %s6 = ssub.s32 1, %s4
  %s7 = scalar_select 0, %s6, %s4
  $region1: #{tpu_custom_call.1} parent=0
    #allocation4 [shape = 'u8[8192]{0}', space=vmem, size = 0x2000, scoped, tag = 'input window, operand 0, single buffered']
    #allocation5 [shape = 's32[1]{0}', space=sflag, size = 0x4, scoped, tag = 'scoped memory for tpu_custom_call.1']
    #allocation6 [shape = 's32[1]{0}', space=sflag, size = 0x4, scoped, tag = 'scoped memory for tpu_custom_call.1']
    #allocation7 [shape = 'u8[16384]{0}', space=vmem, size = 0x4000, scoped, tag = 'output window, operand 0, single buffered']
    %8 = vsyncpa [#allocation5], 0
    %9 = vsyncpa [#allocation6], 0
    // Predicated region
    $region2: #{tpu_custom_call.1} parent=1 // pred_check
      _
    $region3: #{tpu_custom_call.1} parent=1 // pred_check_branch
      %11 = sbr.rel (0) target = $region5
    $region4: #{tpu_custom_call.1} parent=1 // pred_region
      %s13 = ssub.s32 256, 256
      %14 = vsyncadd [#allocation5], %s13
      %s15 = sshll.u32 [#allocation4], 4
      %s16 = int_to_ptr.vmem [resolvable:$true] %s15
      %21 = dma.hbm_to_vmem [thread:$0]  %s0, 256, %s16, [#allocation5], 128, 128, 8
    $region5: #{tpu_custom_call.1} parent=1 // pred_fallthru
      _
    // Predicated region
    $region6: #{tpu_custom_call.1} parent=1 // pred_check
      _
    $region7: #{tpu_custom_call.1} parent=1 // pred_check_branch
      %23 = sbr.rel (0) target = $region9
    $region8: #{tpu_custom_call.1} parent=1 // pred_region
      _
    $region9: #{tpu_custom_call.1} parent=1 // pred_fallthru
      _
    // Predicated region
    $region10: #{tpu_custom_call.1} parent=1 // pred_check
      _
    $region11: #{tpu_custom_call.1} parent=1 // pred_check_branch
      %25 = sbr.rel (0) target = $region13
    $region12: #{tpu_custom_call.1} parent=1 // pred_region
      _
    $region13: #{tpu_custom_call.1} parent=1 // pred_fallthru
      _
    // Predicated region
    $region14: #{tpu_custom_call.1} parent=1 // pred_check
      _
    $region15: #{tpu_custom_call.1} parent=1 // pred_check_branch
      %27 = sbr.rel (0) target = $region17
    $region16: #{tpu_custom_call.1} parent=1 // pred_region
      %28 = dma.done [#allocation5], 256
    $region17: #{tpu_custom_call.1} parent=1 // pred_fallthru
      _
    %v29 = vlaneseq
    %v30 = vand.u32 %v29, 127
    %v31 = vadd.s32 %v30, 128
    %vm32 = vcmp.lt.s32.totalorder %v30, 0
    %v33 = vsub.s32 0, %v30
    %v34 = vsel %vm32, %v33, %v30
    %v35 = vshrl.u32 %v34, 4
    %v36 = vand.u32 %v34, 15
    %v37 = vsub.s32 0, %v36
    %v38 = vsel %vm32, %v37, %v36
    %vm39 = vcmp.lt.s32.totalorder %v31, 0
    %v40 = vsub.s32 0, %v31
    %v41 = vsel %vm39, %v40, %v31
    %v42 = vshrl.u32 %v41, 4
    %v43 = vand.u32 %v41, 15
    %v44 = vsub.s32 0, %v43
    %v45 = vsel %vm39, %v44, %v43
    %vm46 = vcmp.ne.s32.totalorder %v38, 0
    %vm47 = vcmp.ne.s32.totalorder %v45, 0
    %vm48 = vcmp.lt.s32.totalorder %v38, 0
    %vm49 = vcmp.lt.s32.totalorder %v45, 0
    %vm50 = vmand %vm48, %vm46
    %vm51 = vmand %vm49, %vm47
    %v52 = vadd.s32 %v38, 16
    %v53 = vadd.s32 %v45, 16
    %v54 = vsel %vm50, %v52, %v38
    %v55 = vsel %vm51, %v53, %v45
    %56 = vst [vmem:[#allocation2] sm:$0xff] 0.0
    %57 = vst [vmem:[#allocation2 + $0x8] sm:$0xf] 0.0
    %v58 = vld [vmem:[#allocation4] sm:$0xff]
    %60 = vrot.lane.b32.xlu0 %v58, 17
    %v61 = vpop.permute.xlu0 %60
    %v62 = vrot.slane %v61, 4
    %vm63 = vcmask 138240
    %v64 = vsel %vm63, %v62, %v61
    %vm67 = vcmask 1043592
    %vm68 = vcmask 1047556
    %vm69 = vmor %vm68, %vm67
    %70 = vst.msk [vmem:[#allocation2] sm:$0xff] %vm69, %v64
    %vm71 = vcmask 134144
    %72 = vst.msk [vmem:[#allocation2 + $0x8] sm:$0xf] %vm71, %v62
    %v73 = vld [vmem:[#allocation2] sm:$0xff]
    %vm74 = vcmp.ge.s32.totalorder %v54, 1
    %vm75 = vcmp.ge.s32.totalorder %v55, 1
    %v77 = vcombine.high %v73, %v73
    %v79 = vsel %vm74, %v73, 0.0
    %v80 = vsel %vm75, %v77, 0.0
    %81 = vst [vmem:[#allocation3] sm:$0xf] %v79
    %82 = vst [vmem:[#allocation3 + $0x8] sm:$0xf] %v80
    %v83 = vld [vmem:[#allocation2] sm:$0xff]
    %v84 = vld [vmem:[#allocation2 + $0x8] sm:$0xf]
    %v87 = vcombine.low %v83, %v83
    %v88 = vcombine.low %v84, %v84
    %89 = vrot.lane.b32.xlu0 %v87, 127
    %v90 = vpop.permute.xlu0 %89
    %91 = vrot.lane.b32.xlu0 %v83, 127
    %v92 = vpop.permute.xlu0 %91
    %93 = vrot.lane.b32.xlu0 %v88, 127
    %v94 = vpop.permute.xlu0 %93
    %vm95 = vcmask 1039360
    %v96 = vsel %vm95, %v90, %v92
    %v97 = vsel %vm95, %v92, %v94
    %100 = vst [vmem:[#allocation3] sm:$0xf0] %v96
    %101 = vst [vmem:[#allocation3 + $0x8] sm:$0xf0] %v97
    %v102 = vld [vmem:[#allocation2] sm:$0xff]
    %v103 = vld [vmem:[#allocation2 + $0x8] sm:$0xf]
    %vm104 = vcmp.lt.s32.totalorder %v54, 15
    %vm105 = vcmp.lt.s32.totalorder %v55, 15
    %v108 = vcombine.high %v102, %v102
    %109 = vrot.lane.b32.xlu0 %v102, 126
    %v110 = vpop.permute.xlu0 %109
    %111 = vrot.lane.b32.xlu0 %v108, 126
    %v112 = vpop.permute.xlu0 %111
    %113 = vrot.lane.b32.xlu0 %v103, 126
    %v114 = vpop.permute.xlu0 %113
    %vm115 = vcmask 1031168
    %v116 = vsel %vm115, %v110, %v112
    %v117 = vsel %vm115, %v112, %v114
    %v120 = vsel %vm104, %v116, 0.0
    %v121 = vsel %vm105, %v117, 0.0
    %122 = vst [vmem:[#allocation3 + $0x10] sm:$0xf] %v120
    %123 = vst [vmem:[#allocation3 + $0x18] sm:$0xf] %v121
    %v124 = vld [vmem:[#allocation2] sm:$0xff]
    %v125 = vld [vmem:[#allocation2 + $0x8] sm:$0xf]
    %v128 = vcombine.high %v124, %v124
    %129 = vrot.lane.b32.xlu0 %v124, 112
    %v130 = vpop.permute.xlu0 %129
    %131 = vrot.lane.b32.xlu0 %v128, 112
    %v132 = vpop.permute.xlu0 %131
    %133 = vrot.lane.b32.xlu0 %v125, 112
    %v134 = vpop.permute.xlu0 %133
    %vm135 = vcmask 916480
    %v136 = vsel %vm135, %v130, %v132
    %v137 = vsel %vm135, %v132, %v134
    %v140 = vsel %vm74, %v136, 0.0
    %v141 = vsel %vm75, %v137, 0.0
    %v144 = vrot.slane %v140, 4
    %v145 = vrot.slane %v141, 4
    %148 = vst [vmem:[#allocation3 + $0x10] sm:$0xf0] %v144
    %149 = vst [vmem:[#allocation3 + $0x18] sm:$0xf0] %v145
    %v150 = vld [vmem:[#allocation2] sm:$0xff]
    %v151 = vld [vmem:[#allocation2 + $0x8] sm:$0xf]
    %v154 = vcombine.high %v150, %v150
    %155 = vrot.lane.b32.xlu0 %v150, 111
    %v156 = vpop.permute.xlu0 %155
    %157 = vrot.lane.b32.xlu0 %v154, 111
    %v158 = vpop.permute.xlu0 %157
    %159 = vrot.lane.b32.xlu0 %v151, 111
    %v160 = vpop.permute.xlu0 %159
    %vm161 = vcmask 908288
    %v162 = vsel %vm161, %v156, %v158
    %v163 = vsel %vm161, %v158, %v160
    %166 = vst [vmem:[#allocation3 + $0x20] sm:$0xf] %v162
    %167 = vst [vmem:[#allocation3 + $0x28] sm:$0xf] %v163
    %v168 = vld [vmem:[#allocation2] sm:$0xff]
    %v169 = vld [vmem:[#allocation2 + $0x8] sm:$0xf]
    %v172 = vcombine.high %v168, %v168
    %173 = vrot.lane.b32.xlu0 %v168, 110
    %v174 = vpop.permute.xlu0 %173
    %175 = vrot.lane.b32.xlu0 %v172, 110
    %v176 = vpop.permute.xlu0 %175
    %177 = vrot.lane.b32.xlu0 %v169, 110
    %v178 = vpop.permute.xlu0 %177
    %vm179 = vcmask 900096
    %v180 = vsel %vm179, %v174, %v176
    %v181 = vsel %vm179, %v176, %v178
    %v184 = vsel %vm104, %v180, 0.0
    %v185 = vsel %vm105, %v181, 0.0
    %v188 = vrot.slane %v184, 4
    %v189 = vrot.slane %v185, 4
    %192 = vst [vmem:[#allocation3 + $0x20] sm:$0xf0] %v188
    %193 = vst [vmem:[#allocation3 + $0x28] sm:$0xf0] %v189
    %v194 = vld [vmem:[#allocation2] sm:$0xff]
    %v195 = vld [vmem:[#allocation2 + $0x8] sm:$0xf]
    %v198 = vcombine.high %v194, %v194
    %199 = vrot.lane.b32.xlu0 %v194, 96
    %v200 = vpop.permute.xlu0 %199
    %201 = vrot.lane.b32.xlu0 %v198, 96
    %v202 = vpop.permute.xlu0 %201
    %203 = vrot.lane.b32.xlu0 %v195, 96
    %v204 = vpop.permute.xlu0 %203
    %vm205 = vcmask 785408
    %v206 = vsel %vm205, %v200, %v202
    %v207 = vsel %vm205, %v202, %v204
    %v210 = vsel %vm74, %v206, 0.0
    %v211 = vsel %vm75, %v207, 0.0
    %212 = vst [vmem:[#allocation3 + $0x30] sm:$0xf] %v210
    %213 = vst [vmem:[#allocation3 + $0x38] sm:$0xf] %v211
    %v214 = vld [vmem:[#allocation2] sm:$0xff]
    %v215 = vld [vmem:[#allocation2 + $0x8] sm:$0xf]
    %v218 = vcombine.low %v214, %v214
    %v219 = vcombine.low %v215, %v215
    %220 = vrot.lane.b32.xlu0 %v218, 95
    %v221 = vpop.permute.xlu0 %220
    %222 = vrot.lane.b32.xlu0 %v214, 95
    %v223 = vpop.permute.xlu0 %222
    %224 = vrot.lane.b32.xlu0 %v219, 95
    %v225 = vpop.permute.xlu0 %224
    %vm226 = vcmask 777216
    %v227 = vsel %vm226, %v221, %v223
    %v228 = vsel %vm226, %v223, %v225
    %231 = vst [vmem:[#allocation3 + $0x30] sm:$0xf0] %v227
    %232 = vst [vmem:[#allocation3 + $0x38] sm:$0xf0] %v228
    %v233 = vld [vmem:[#allocation2] sm:$0xff]
    %v234 = vld [vmem:[#allocation2 + $0x8] sm:$0xf]
    %v237 = vcombine.high %v233, %v233
    %238 = vrot.lane.b32.xlu0 %v233, 94
    %v239 = vpop.permute.xlu0 %238
    %240 = vrot.lane.b32.xlu0 %v237, 94
    %v241 = vpop.permute.xlu0 %240
    %242 = vrot.lane.b32.xlu0 %v234, 94
    %v243 = vpop.permute.xlu0 %242
    %vm244 = vcmask 769024
    %v245 = vsel %vm244, %v239, %v241
    %v246 = vsel %vm244, %v241, %v243
    %v249 = vsel %vm104, %v245, 0.0
    %v250 = vsel %vm105, %v246, 0.0
    %251 = vst [vmem:[#allocation3 + $0x40] sm:$0xf] %v249
    %252 = vst [vmem:[#allocation3 + $0x48] sm:$0xf] %v250
    %v253 = vld [vmem:[%s1] sm:$0xff]
    %v254 = vld [vmem:[#allocation3] sm:$0xff]
    %v255 = vld [vmem:[#allocation3 + $0x8] sm:$0xff]
    %v256 = vld [vmem:[#allocation3 + $0x10] sm:$0xff]
    %v257 = vld [vmem:[#allocation3 + $0x18] sm:$0xff]
    %v258 = vld [vmem:[#allocation3 + $0x20] sm:$0xff]
    %v259 = vld [vmem:[#allocation3 + $0x28] sm:$0xff]
    %v260 = vld [vmem:[#allocation3 + $0x30] sm:$0xff]
    %v261 = vld [vmem:[#allocation3 + $0x38] sm:$0xff]
    %v262 = vld [vmem:[#allocation3 + $0x40] sm:$0xf]
    %v263 = vld [vmem:[#allocation3 + $0x48] sm:$0xf]
    %v264 = vld [vmem:[%s2] sm:$0xff]
    %266 = vset.pattern.permute.xlu0 0
    %267 = vperm.xlu0 %266, %v264
    %v268 = vpop.permute.xlu0 %267
    %vm270 = vcmask 293888
    %v272 = vsel %vm270, %v253, 0
    %vm274 = vcmask 1043456
    %v276 = vsel %vm274, %v262, 0
    %v279 = vsel %vm274, %v263, 0
    %281 = vmatprep.subr.mxu0 %v255
    %282 = vmatpush1.msra.mxu0 %v254
    %283 = vmatprep.subr.mxu0 %v257
    %284 = vmatpush1.msra.mxu0 %v256
    %285 = vmatprep.subr.mxu0 %v259
    %286 = vmatpush1.msra.mxu0 %v258
    %287 = vmatprep.subr.mxu0 %v261
    %288 = vmatpush1.msra.mxu0 %v260
    %289 = vmatprep.subr.mxu0 %v279
    %290 = vmatpush1.msra.mxu0 %v276
    %291 = vmatprep.subr.mxu0 0.0
    %292 = vmatpush1.msra.mxu0 0.0
    %293 = vmatprep.subr.mxu0 0.0
    %294 = vmatpush1.msra.mxu0 0.0
    %295 = vmatprep.subr.mxu0 0.0
    %296 = vmatpush1.msra.mxu0 0.0
    %297 = vmatprep.subr.mxu0 0.0
    %298 = vmatpush1.msra.mxu0 0.0
    %299 = vmatprep.subr.mxu0 0.0
    %300 = vmatpush1.msra.mxu0 0.0
    %301 = vmatprep.subr.mxu0 0.0
    %302 = vmatpush1.msra.mxu0 0.0
    %303 = vmatprep.subr.mxu0 0.0
    %304 = vmatpush1.msra.mxu0 0.0
    %305 = vmatprep.subr.mxu0 0.0
    %306 = vmatpush1.msra.mxu0 0.0
    %307 = vmatprep.subr.mxu0 0.0
    %308 = vmatpush1.msra.mxu0 0.0
    %309 = vmatprep.subr.mxu0 0.0
    %310 = vmatpush1.msra.mxu0 0.0
    %311 = vmatprep.subr.mxu0 0.0
    %312 = vmatpush1.msra.mxu0 0.0
    %313 = vmatprep.subr.mxu0 0.0
    %314 = vmatpush1.msra.mxu0 0.0
    %315 = vmatprep.subr.mxu0 0.0
    %316 = vmatpush1.msra.mxu0 0.0
    %317 = vmatprep.subr.mxu0 0.0
    %318 = vmatpush1.msra.mxu0 0.0
    %319 = vmatprep.subr.mxu0 0.0
    %320 = vmatpush1.msra.mxu0 0.0
    %321 = vmatprep.subr.mxu0 0.0
    %322 = vmatpush1.msra.mxu0 0.0
    %323 = vmatprep.subr.mxu0 0.0
    %324 = vmatpush1.msra.mxu0 0.0
    %325 = vmatprep.subr.mxu0 0.0
    %326 = vmatpush1.msra.mxu0 0.0
    %327 = vmatprep.subr.mxu0 0.0
    %328 = vmatpush1.msra.mxu0 0.0
    %329 = vmatprep.subr.mxu0 0.0
    %330 = vmatpush1.msra.mxu0 0.0
    %331 = vmatprep.subr.mxu0 0.0
    %332 = vmatpush1.msra.mxu0 0.0
    %333 = vmatprep.subr.mxu0 0.0
    %334 = vmatpush1.msra.mxu0 0.0
    %335 = vmatprep.subr.mxu0 0.0
    %336 = vmatpush1.msra.mxu0 0.0
    %337 = vmatprep.subr.mxu0 0.0
    %338 = vmatpush1.msra.mxu0 0.0
    %339 = vmatprep.subr.mxu0 0.0
    %340 = vmatpush1.msra.mxu0 0.0
    %341 = vmatprep.subr.mxu0 0.0
    %342 = vmatpush1.msra.mxu0 0.0
    %343 = vmatprep.subr.mxu0 0.0
    %344 = vmatpush1.msra.mxu0 0.0
    %345 = vmatprep.mubr.f32.mxu0 0.0
    %346 = vmatmul.mubr.f32.gmra.mrb[0].mxu0 %v272
    %v347 = vpop.f32.mrb[0].mxu0
    %v348 = vadd.f32 %v268, %v347
    %v349 = vpop.f32.mrb[0].mxu0
    %v350 = vadd.f32 %v268, %v349
    %351 = vdwg.mxu0
    %v352 = vmax.f32 %v348, 0.0
    %v353 = vmax.f32 %v350, 0.0
    %354 = vst [vmem:[#allocation7] sm:$0xff] %v352
    %355 = vst [vmem:[#allocation7 + $0x8] sm:$0xff] %v353
    %s356 = scalar_lea.vmem [#allocation4], 8
    %v357 = vld [vmem:[%s356] sm:$0xff]
    %359 = vrot.lane.b32.xlu0 %v357, 17
    %v360 = vpop.permute.xlu0 %359
    %v361 = vrot.slane %v360, 4
    %v362 = vsel %vm63, %v361, %v360
    %365 = vst.msk [vmem:[#allocation2] sm:$0xff] %vm69, %v362
    %366 = vst.msk [vmem:[#allocation2 + $0x8] sm:$0xf] %vm71, %v361
    %v367 = vld [vmem:[#allocation2] sm:$0xff]
    %v369 = vcombine.high %v367, %v367
    %v371 = vsel %vm74, %v367, 0.0
    %v372 = vsel %vm75, %v369, 0.0
    %373 = vst [vmem:[#allocation3] sm:$0xf] %v371
    %374 = vst [vmem:[#allocation3 + $0x8] sm:$0xf] %v372
    %v375 = vld [vmem:[#allocation2] sm:$0xff]
    %v376 = vld [vmem:[#allocation2 + $0x8] sm:$0xf]
    %v379 = vcombine.low %v375, %v375
    %v380 = vcombine.low %v376, %v376
    %381 = vrot.lane.b32.xlu0 %v379, 127
    %v382 = vpop.permute.xlu0 %381
    %383 = vrot.lane.b32.xlu0 %v375, 127
    %v384 = vpop.permute.xlu0 %383
    %385 = vrot.lane.b32.xlu0 %v380, 127
    %v386 = vpop.permute.xlu0 %385
    %v387 = vsel %vm95, %v382, %v384
    %v388 = vsel %vm95, %v384, %v386
    %391 = vst [vmem:[#allocation3] sm:$0xf0] %v387
    %392 = vst [vmem:[#allocation3 + $0x8] sm:$0xf0] %v388
    %v393 = vld [vmem:[#allocation2] sm:$0xff]
    %v394 = vld [vmem:[#allocation2 + $0x8] sm:$0xf]
    %v397 = vcombine.high %v393, %v393
    %398 = vrot.lane.b32.xlu0 %v393, 126
    %v399 = vpop.permute.xlu0 %398
    %400 = vrot.lane.b32.xlu0 %v397, 126
    %v401 = vpop.permute.xlu0 %400
    %402 = vrot.lane.b32.xlu0 %v394, 126
    %v403 = vpop.permute.xlu0 %402
    %v404 = vsel %vm115, %v399, %v401
    %v405 = vsel %vm115, %v401, %v403
    %v408 = vsel %vm104, %v404, 0.0
    %v409 = vsel %vm105, %v405, 0.0
    %410 = vst [vmem:[#allocation3 + $0x10] sm:$0xf] %v408
    %411 = vst [vmem:[#allocation3 + $0x18] sm:$0xf] %v409
    %v412 = vld [vmem:[#allocation2] sm:$0xff]
    %v413 = vld [vmem:[#allocation2 + $0x8] sm:$0xf]
    %v416 = vcombine.high %v412, %v412
    %417 = vrot.lane.b32.xlu0 %v412, 112
    %v418 = vpop.permute.xlu0 %417
    %419 = vrot.lane.b32.xlu0 %v416, 112
    %v420 = vpop.permute.xlu0 %419
    %421 = vrot.lane.b32.xlu0 %v413, 112
    %v422 = vpop.permute.xlu0 %421
    %v423 = vsel %vm135, %v418, %v420
    %v424 = vsel %vm135, %v420, %v422
    %v427 = vsel %vm74, %v423, 0.0
    %v428 = vsel %vm75, %v424, 0.0
    %v431 = vrot.slane %v427, 4
    %v432 = vrot.slane %v428, 4
    %435 = vst [vmem:[#allocation3 + $0x10] sm:$0xf0] %v431
    %436 = vst [vmem:[#allocation3 + $0x18] sm:$0xf0] %v432
    %v437 = vld [vmem:[#allocation2] sm:$0xff]
    %v438 = vld [vmem:[#allocation2 + $0x8] sm:$0xf]
    %v441 = vcombine.high %v437, %v437
    %442 = vrot.lane.b32.xlu0 %v437, 111
    %v443 = vpop.permute.xlu0 %442
    %444 = vrot.lane.b32.xlu0 %v441, 111
    %v445 = vpop.permute.xlu0 %444
    %446 = vrot.lane.b32.xlu0 %v438, 111
    %v447 = vpop.permute.xlu0 %446
    %v448 = vsel %vm161, %v443, %v445
    %v449 = vsel %vm161, %v445, %v447
    %452 = vst [vmem:[#allocation3 + $0x20] sm:$0xf] %v448
    %453 = vst [vmem:[#allocation3 + $0x28] sm:$0xf] %v449
    %v454 = vld [vmem:[#allocation2] sm:$0xff]
    %v455 = vld [vmem:[#allocation2 + $0x8] sm:$0xf]
    %v458 = vcombine.high %v454, %v454
    %459 = vrot.lane.b32.xlu0 %v454, 110
    %v460 = vpop.permute.xlu0 %459
    %461 = vrot.lane.b32.xlu0 %v458, 110
    %v462 = vpop.permute.xlu0 %461
    %463 = vrot.lane.b32.xlu0 %v455, 110
    %v464 = vpop.permute.xlu0 %463
    %v465 = vsel %vm179, %v460, %v462
    %v466 = vsel %vm179, %v462, %v464
    %v469 = vsel %vm104, %v465, 0.0
    %v470 = vsel %vm105, %v466, 0.0
    %v473 = vrot.slane %v469, 4
    %v474 = vrot.slane %v470, 4
    %477 = vst [vmem:[#allocation3 + $0x20] sm:$0xf0] %v473
    %478 = vst [vmem:[#allocation3 + $0x28] sm:$0xf0] %v474
    %v479 = vld [vmem:[#allocation2] sm:$0xff]
    %v480 = vld [vmem:[#allocation2 + $0x8] sm:$0xf]
    %v483 = vcombine.high %v479, %v479
    %484 = vrot.lane.b32.xlu0 %v479, 96
    %v485 = vpop.permute.xlu0 %484
    %486 = vrot.lane.b32.xlu0 %v483, 96
    %v487 = vpop.permute.xlu0 %486
    %488 = vrot.lane.b32.xlu0 %v480, 96
    %v489 = vpop.permute.xlu0 %488
    %v490 = vsel %vm205, %v485, %v487
    %v491 = vsel %vm205, %v487, %v489
    %v494 = vsel %vm74, %v490, 0.0
    %v495 = vsel %vm75, %v491, 0.0
    %496 = vst [vmem:[#allocation3 + $0x30] sm:$0xf] %v494
    %497 = vst [vmem:[#allocation3 + $0x38] sm:$0xf] %v495
    %v498 = vld [vmem:[#allocation2] sm:$0xff]
    %v499 = vld [vmem:[#allocation2 + $0x8] sm:$0xf]
    %v502 = vcombine.low %v498, %v498
    %v503 = vcombine.low %v499, %v499
    %504 = vrot.lane.b32.xlu0 %v502, 95
    %v505 = vpop.permute.xlu0 %504
    %506 = vrot.lane.b32.xlu0 %v498, 95
    %v507 = vpop.permute.xlu0 %506
    %508 = vrot.lane.b32.xlu0 %v503, 95
    %v509 = vpop.permute.xlu0 %508
    %v510 = vsel %vm226, %v505, %v507
    %v511 = vsel %vm226, %v507, %v509
    %514 = vst [vmem:[#allocation3 + $0x30] sm:$0xf0] %v510
    %515 = vst [vmem:[#allocation3 + $0x38] sm:$0xf0] %v511
    %v516 = vld [vmem:[#allocation2] sm:$0xff]
    %v517 = vld [vmem:[#allocation2 + $0x8] sm:$0xf]
    %v520 = vcombine.high %v516, %v516
    %521 = vrot.lane.b32.xlu0 %v516, 94
    %v522 = vpop.permute.xlu0 %521
    %523 = vrot.lane.b32.xlu0 %v520, 94
    %v524 = vpop.permute.xlu0 %523
    %525 = vrot.lane.b32.xlu0 %v517, 94
    %v526 = vpop.permute.xlu0 %525
    %v527 = vsel %vm244, %v522, %v524
    %v528 = vsel %vm244, %v524, %v526
    %v531 = vsel %vm104, %v527, 0.0
    %v532 = vsel %vm105, %v528, 0.0
    %533 = vst [vmem:[#allocation3 + $0x40] sm:$0xf] %v531
    %534 = vst [vmem:[#allocation3 + $0x48] sm:$0xf] %v532
    %v535 = vld [vmem:[%s1] sm:$0xff]
    %v536 = vld [vmem:[#allocation3] sm:$0xff]
    %v537 = vld [vmem:[#allocation3 + $0x8] sm:$0xff]
    %v538 = vld [vmem:[#allocation3 + $0x10] sm:$0xff]
    %v539 = vld [vmem:[#allocation3 + $0x18] sm:$0xff]
    %v540 = vld [vmem:[#allocation3 + $0x20] sm:$0xff]
    %v541 = vld [vmem:[#allocation3 + $0x28] sm:$0xff]
    %v542 = vld [vmem:[#allocation3 + $0x30] sm:$0xff]
    %v543 = vld [vmem:[#allocation3 + $0x38] sm:$0xff]
    %v544 = vld [vmem:[#allocation3 + $0x40] sm:$0xf]
    %v545 = vld [vmem:[#allocation3 + $0x48] sm:$0xf]
    %v546 = vld [vmem:[%s2] sm:$0xff]
    %548 = vset.pattern.permute.xlu0 0
    %549 = vperm.xlu0 %548, %v546
    %v550 = vpop.permute.xlu0 %549
    %v553 = vsel %vm270, %v535, 0
    %v556 = vsel %vm274, %v544, 0
    %v559 = vsel %vm274, %v545, 0
    %561 = vmatprep.subr.mxu0 %v537
    %562 = vmatpush1.msra.mxu0 %v536
    %563 = vmatprep.subr.mxu0 %v539
    %564 = vmatpush1.msra.mxu0 %v538
    %565 = vmatprep.subr.mxu0 %v541
    %566 = vmatpush1.msra.mxu0 %v540
    %567 = vmatprep.subr.mxu0 %v543
    %568 = vmatpush1.msra.mxu0 %v542
    %569 = vmatprep.subr.mxu0 %v559
    %570 = vmatpush1.msra.mxu0 %v556
    %571 = vmatprep.subr.mxu0 0.0
    %572 = vmatpush1.msra.mxu0 0.0
    %573 = vmatprep.subr.mxu0 0.0
    %574 = vmatpush1.msra.mxu0 0.0
    %575 = vmatprep.subr.mxu0 0.0
    %576 = vmatpush1.msra.mxu0 0.0
    %577 = vmatprep.subr.mxu0 0.0
    %578 = vmatpush1.msra.mxu0 0.0
    %579 = vmatprep.subr.mxu0 0.0
    %580 = vmatpush1.msra.mxu0 0.0
    %581 = vmatprep.subr.mxu0 0.0
    %582 = vmatpush1.msra.mxu0 0.0
    %583 = vmatprep.subr.mxu0 0.0
    %584 = vmatpush1.msra.mxu0 0.0
    %585 = vmatprep.subr.mxu0 0.0
    %586 = vmatpush1.msra.mxu0 0.0
    %587 = vmatprep.subr.mxu0 0.0
    %588 = vmatpush1.msra.mxu0 0.0
    %589 = vmatprep.subr.mxu0 0.0
    %590 = vmatpush1.msra.mxu0 0.0
    %591 = vmatprep.subr.mxu0 0.0
    %592 = vmatpush1.msra.mxu0 0.0
    %593 = vmatprep.subr.mxu0 0.0
    %594 = vmatpush1.msra.mxu0 0.0
    %595 = vmatprep.subr.mxu0 0.0
    %596 = vmatpush1.msra.mxu0 0.0
    %597 = vmatprep.subr.mxu0 0.0
    %598 = vmatpush1.msra.mxu0 0.0
    %599 = vmatprep.subr.mxu0 0.0
    %600 = vmatpush1.msra.mxu0 0.0
    %601 = vmatprep.subr.mxu0 0.0
    %602 = vmatpush1.msra.mxu0 0.0
    %603 = vmatprep.subr.mxu0 0.0
    %604 = vmatpush1.msra.mxu0 0.0
    %605 = vmatprep.subr.mxu0 0.0
    %606 = vmatpush1.msra.mxu0 0.0
    %607 = vmatprep.subr.mxu0 0.0
    %608 = vmatpush1.msra.mxu0 0.0
    %609 = vmatprep.subr.mxu0 0.0
    %610 = vmatpush1.msra.mxu0 0.0
    %611 = vmatprep.subr.mxu0 0.0
    %612 = vmatpush1.msra.mxu0 0.0
    %613 = vmatprep.subr.mxu0 0.0
    %614 = vmatpush1.msra.mxu0 0.0
    %615 = vmatprep.subr.mxu0 0.0
    %616 = vmatpush1.msra.mxu0 0.0
    %617 = vmatprep.subr.mxu0 0.0
    %618 = vmatpush1.msra.mxu0 0.0
    %619 = vmatprep.subr.mxu0 0.0
    %620 = vmatpush1.msra.mxu0 0.0
    %621 = vmatprep.subr.mxu0 0.0
    %622 = vmatpush1.msra.mxu0 0.0
    %623 = vmatprep.subr.mxu0 0.0
    %624 = vmatpush1.msra.mxu0 0.0
    %625 = vmatprep.mubr.f32.mxu0 0.0
    %626 = vmatmul.mubr.f32.gmra.mrb[0].mxu0 %v553
    %v627 = vpop.f32.mrb[0].mxu0
    %v628 = vadd.f32 %v550, %v627
    %v629 = vpop.f32.mrb[0].mxu0
    %v630 = vadd.f32 %v550, %v629
    %631 = vdwg.mxu0
    %v632 = vmax.f32 %v628, 0.0
    %v633 = vmax.f32 %v630, 0.0
    %s634 = scalar_lea.vmem [#allocation7], 16
    %635 = vst [vmem:[%s634] sm:$0xff] %v632
    %636 = vst [vmem:[%s634 + $0x8] sm:$0xff] %v633
    // Predicated region
    $region18: #{tpu_custom_call.1} parent=1 // pred_check
      _
    $region19: #{tpu_custom_call.1} parent=1 // pred_check_branch
      %638 = sbr.rel (0) target = $region21
    $region20: #{tpu_custom_call.1} parent=1 // pred_region
      %s640 = ssub.s32 512, 512
      %641 = vsyncadd [#allocation6], %s640
      %s642 = sshll.u32 [#allocation7], 4
      %s643 = int_to_ptr.vmem [resolvable:$true] %s642
      %648 = dma.vmem_to_hbm [thread:$0]  %s643, 512, %s3, [#allocation6], 256, 256, 16
    $region21: #{tpu_custom_call.1} parent=1 // pred_fallthru
      _
    // Predicated region
    $region22: #{tpu_custom_call.1} parent=1 // pred_check
      _
    $region23: #{tpu_custom_call.1} parent=1 // pred_check_branch
      %650 = sbr.rel (0) target = $region25
    $region24: #{tpu_custom_call.1} parent=1 // pred_region
      %651 = dma.done [#allocation6], 512
    $region25: #{tpu_custom_call.1} parent=1 // pred_fallthru
      _
    %652 = vsyncpa [#allocation5], 1
    %653 = vsyncpa [#allocation6], 1

</llo_original>
